<compile_context>
chip_gen: v7x
topology: tpu7x:2x2x1
jax: 0.10.0
libtpu: 0.0.40
codegen_flags: <defaults>
</compile_context>

<pallas_src>
import functools

import jax
import jax.numpy as jnp
import numpy as np
from jax import lax
from jax.experimental import pallas as pl
from jax.experimental.pallas import tpu as pltpu


def _round_up(x: int, m: int) -> int:
    return ((x + m - 1) // m) * m


def _aggregator_kernel(x_ref, w_ref, b_ref, out_ref, sum_ref, *, inv_n):
    """Fused mean(features, 0) -> Linear -> ReLU.

    x_ref  : [TM, D_in]     current row tile (zero-padded rows contribute 0)
    w_ref  : [D_out, D_in]  resident weight (nn.Linear layout, no transpose)
    b_ref  : [1, D_out]     resident bias
    out_ref: [1, D_out]     written only on the last grid step
    sum_ref: [1, D_in]      f32 running column sum (VMEM scratch)
    """
    i = pl.program_id(0)

    @pl.when(i == 0)
    def _init():
        sum_ref[...] = jnp.zeros_like(sum_ref)

    # Column-wise partial sum of this row tile (XLU sublane reduction).
    sum_ref[...] += jnp.sum(x_ref[...].astype(jnp.float32), axis=0, keepdims=True)

    @pl.when(i == pl.num_programs(0) - 1)
    def _finalize():
        mean = sum_ref[...] * inv_n                              # [1, D_in]
        # mean @ W^T, contracting D_in on both operands (MXU, f32 accumulate).
        y = lax.dot_general(
            mean, w_ref[...],
            dimension_numbers=(((1,), (1,)), ((), ())),
            preferred_element_type=jnp.float32,
        )                                                        # [1, D_out]
        y = y + b_ref[...]
        out_ref[...] = jnp.maximum(y, 0.0).astype(out_ref.dtype)


@jax.jit
def aggregator_forward(features, weight, bias):
    """features: [N, D_in]; weight: [D_out, D_in] (nn.Linear layout); bias: [D_out].

    Returns relu(mean(features, axis=0) @ weight.T + bias), shape [D_out].
    """
    n, d_in = features.shape
    d_out = weight.shape[0]

    # Row tile: largest multiple of the f32 sublane count (8) up to 1024,
    # keeping the double-buffered input tile far under the VMEM budget.
    n_pad = _round_up(n, 8)
    tm = min(1024, n_pad)
    while 2 * tm * d_in * 4 > (8 << 20) and tm > 8:   # 2 bufs x tile <= 8 MiB
        tm //= 2
    tm = max(8, _round_up(tm, 8))
    n_pad = _round_up(n_pad, tm)
    if n_pad != n:
        # Zero rows do not change the column sum; we divide by the true N.
        features = jnp.pad(features, ((0, n_pad - n), (0, 0)))
    grid = (n_pad // tm,)

    b2d = bias.reshape(1, d_out)

    flops = 2 * n * d_in + 2 * d_in * d_out
    bytes_accessed = 4 * (n_pad * d_in + d_in * d_out + 2 * d_out)

    out2d = pl.pallas_call(
        functools.partial(_aggregator_kernel, inv_n=1.0 / n),
        out_shape=jax.ShapeDtypeStruct((1, d_out), jnp.float32),
        grid_spec=pltpu.PrefetchScalarGridSpec(
            num_scalar_prefetch=0,
            grid=grid,
            in_specs=[
                pl.BlockSpec((tm, d_in), lambda i: (i, 0)),      # streamed row tiles
                pl.BlockSpec((d_out, d_in), lambda i: (0, 0)),   # W: VMEM resident
                pl.BlockSpec((1, d_out), lambda i: (0, 0)),      # bias: VMEM resident
            ],
            out_specs=pl.BlockSpec((1, d_out), lambda i: (0, 0)),
            scratch_shapes=[pltpu.VMEM((1, d_in), jnp.float32)],
        ),
        compiler_params=pltpu.CompilerParams(
            dimension_semantics=("arbitrary",),   # row axis is a reduction
            vmem_limit_bytes=32 * 1024 * 1024,    # safe on v5e/v6e/v7x
        ),
        cost_estimate=pl.CostEstimate(
            flops=flops, transcendentals=0, bytes_accessed=bytes_accessed),
    )(features, weight, b2d)
    return out2d[0]


def _reference(features, weight, bias):
    return jax.nn.relu(jnp.mean(features, axis=0) @ weight.T + bias)


if __name__ == "__main__":
    key = jax.random.PRNGKey(0)
    k_x, k_w1, k_b1, k_w2, k_b2 = jax.random.split(key, 5)

    # --- Case 1: the literal spec data: 5 nodes x 2 features, Linear(2, 16) ---
    feats_np = np.array(
        [[5, 10], [6, 9], [4, 11], [5, 10], [6, 9]], dtype=np.float32)
    features_small = jnp.asarray(feats_np)                     # [5, 2]
    d_in_s, d_out_s = 2, 16
    bound_s = 1.0 / jnp.sqrt(jnp.float32(d_in_s))
    w_small = jax.random.uniform(k_w1, (d_out_s, d_in_s), jnp.float32,
                                 -bound_s, bound_s)
    b_small = jax.random.uniform(k_b1, (d_out_s,), jnp.float32,
                                 -bound_s, bound_s)

    out_small = jax.block_until_ready(
        aggregator_forward(features_small, w_small, b_small))
    ref_small = _reference(features_small, w_small, b_small)
    assert out_small.shape == (d_out_s,)
    assert jnp.allclose(out_small, ref_small, atol=1e-5, rtol=1e-4)

    # --- Case 2: multi-tile grid path: 2600 nodes x 32 features, Linear(32, 16) ---
    N, D_IN, D_OUT = 2600, 32, 16
    features_big = jax.random.normal(k_x, (N, D_IN), dtype=jnp.float32)
    bound = 1.0 / jnp.sqrt(jnp.float32(D_IN))
    w_big = jax.random.uniform(k_w2, (D_OUT, D_IN), jnp.float32, -bound, bound)
    b_big = jax.random.uniform(k_b2, (D_OUT,), jnp.float32, -bound, bound)

    out_big = jax.block_until_ready(aggregator_forward(features_big, w_big, b_big))
    ref_big = _reference(features_big, w_big, b_big)
    assert out_big.shape == (D_OUT,)
    assert jnp.allclose(out_big, ref_big, atol=1e-5, rtol=1e-4)

    print("KERNEL_OK")
</pallas_src>

<mosaic_0001>
module attributes {stable_mosaic.version = 11 : i64} {
  func.func @_aggregator_kernel(%arg0: i32, %arg1: memref<8x2xf32, #tpu.memory_space<vmem>>, %arg2: memref<16x2xf32, #tpu.memory_space<vmem>>, %arg3: memref<1x16xf32, #tpu.memory_space<vmem>>, %arg4: memref<1x16xf32, #tpu.memory_space<vmem>>, %arg5: memref<1x2xf32, #tpu.memory_space<vmem>>) attributes {dimension_semantics = [#tpu.dimension_semantics<arbitrary>], iteration_bounds = array<i64: 1>, scalar_prefetch = 0 : i64, scratch_operands = 1 : i64, tpu.core_type = #tpu.core_type<tc>, window_params = [{transform_indices = @transform_0, window_bounds = array<i64: 8, 2>}, {pipeline_mode = #tpu.pipeline_mode<synchronous>, transform_indices = @transform_1, window_bounds = array<i64: 16, 2>}, {pipeline_mode = #tpu.pipeline_mode<synchronous>, transform_indices = @transform_2, window_bounds = array<i64: 1, 16>}, {pipeline_mode = #tpu.pipeline_mode<synchronous>, transform_indices = @transform_3, window_bounds = array<i64: 1, 16>}]} {
    %c0_i32 = arith.constant 0 : i32
    %0 = arith.cmpi eq, %arg0, %c0_i32 : i32
    %1 = arith.extui %0 : i1 to i32
    %c0_i32_0 = arith.constant 0 : i32
    %2 = arith.cmpi ne, %1, %c0_i32_0 : i32
    scf.if %2 {
      %cst_8 = arith.constant 0.000000e+00 : f32
      %12 = vector.broadcast %cst_8 : f32 to vector<1x2xf32>
      %c0_9 = arith.constant 0 : index
      %c0_10 = arith.constant 0 : index
      %13 = vector.load %arg5[%c0_9, %c0_10] : memref<1x2xf32, #tpu.memory_space<vmem>>, vector<1x2xf32>
      tpu.vector_store %arg5[%c0_9, %c0_10], %12 {strides = array<i32>} : memref<1x2xf32, #tpu.memory_space<vmem>>, vector<1x2xf32>,
    } else {
    }
    %c0 = arith.constant 0 : index
    %c0_1 = arith.constant 0 : index
    %3 = vector.load %arg5[%c0, %c0_1] : memref<1x2xf32, #tpu.memory_space<vmem>>, vector<1x2xf32>
    %c0_2 = arith.constant 0 : index
    %c0_3 = arith.constant 0 : index
    %4 = vector.load %arg1[%c0_2, %c0_3] : memref<8x2xf32, #tpu.memory_space<vmem>>, vector<8x2xf32>
    %cst = arith.constant dense<0.000000e+00> : vector<2xf32>
    %5 = vector.multi_reduction <add>, %4, %cst [0] : vector<8x2xf32> to vector<2xf32>
    %6 = vector.shape_cast %5 : vector<2xf32> to vector<1x2xf32>
    %7 = arith.addf %3, %6 : vector<1x2xf32>
    %c0_4 = arith.constant 0 : index
    %c0_5 = arith.constant 0 : index
    %8 = vector.load %arg5[%c0_4, %c0_5] : memref<1x2xf32, #tpu.memory_space<vmem>>, vector<1x2xf32>
    tpu.vector_store %arg5[%c0_4, %c0_5], %7 {strides = array<i32>} : memref<1x2xf32, #tpu.memory_space<vmem>>, vector<1x2xf32>,
    %c0_i32_6 = arith.constant 0 : i32
    %9 = arith.cmpi eq, %arg0, %c0_i32_6 : i32
    %10 = arith.extui %9 : i1 to i32
    %c0_i32_7 = arith.constant 0 : i32
    %11 = arith.cmpi ne, %10, %c0_i32_7 : i32
    scf.if %11 {
      %c0_8 = arith.constant 0 : index
      %c0_9 = arith.constant 0 : index
      %12 = vector.load %arg5[%c0_8, %c0_9] : memref<1x2xf32, #tpu.memory_space<vmem>>, vector<1x2xf32>
      %cst_10 = arith.constant 2.000000e-01 : f32
      %13 = vector.broadcast %cst_10 : f32 to vector<1x2xf32>
      %14 = arith.mulf %12, %13 : vector<1x2xf32>
      %c0_11 = arith.constant 0 : index
      %c0_12 = arith.constant 0 : index
      %15 = vector.load %arg2[%c0_11, %c0_12] : memref<16x2xf32, #tpu.memory_space<vmem>>, vector<16x2xf32>
      %cst_13 = arith.constant dense<0.000000e+00> : vector<1x16xf32>
      %16 = tpu.matmul %14, %15, %cst_13 {dimension_numbers = #tpu.dot_dimension_numbers<[1], [1], [0], [0], [0, 0, 1, 0], [], []>} : vector<1x2xf32>, vector<16x2xf32>, vector<1x16xf32> -> vector<1x16xf32>
      %c0_14 = arith.constant 0 : index
      %c0_15 = arith.constant 0 : index
      %17 = vector.load %arg3[%c0_14, %c0_15] : memref<1x16xf32, #tpu.memory_space<vmem>>, vector<1x16xf32>
      %18 = arith.addf %16, %17 : vector<1x16xf32>
      %cst_16 = arith.constant 0.000000e+00 : f32
      %19 = vector.broadcast %cst_16 : f32 to vector<1x16xf32>
      %20 = arith.maximumf %18, %19 : vector<1x16xf32>
      %c0_17 = arith.constant 0 : index
      %c0_18 = arith.constant 0 : index
      %21 = vector.load %arg4[%c0_17, %c0_18] : memref<1x16xf32, #tpu.memory_space<vmem>>, vector<1x16xf32>
      tpu.vector_store %arg4[%c0_17, %c0_18], %20 {strides = array<i32>} : memref<1x16xf32, #tpu.memory_space<vmem>>, vector<1x16xf32>,
    } else {
    }
    return
  }
  func.func @transform_0(%arg0: i32) -> (i32, i32) {
    %c0_i32 = arith.constant 0 : i32
    %c0_i32_0 = arith.constant 0 : i32
    return %arg0, %c0_i32 : i32, i32
  }
  func.func @transform_1(%arg0: i32) -> (i32, i32) {
    %c0_i32 = arith.constant 0 : i32
    %c0_i32_0 = arith.constant 0 : i32
    %c0_i32_1 = arith.constant 0 : i32
    return %c0_i32, %c0_i32_0 : i32, i32
  }
  func.func @transform_2(%arg0: i32) -> (i32, i32) {
    %c0_i32 = arith.constant 0 : i32
    %c0_i32_0 = arith.constant 0 : i32
    %c0_i32_1 = arith.constant 0 : i32
    return %c0_i32, %c0_i32_0 : i32, i32
  }
  func.func @transform_3(%arg0: i32) -> (i32, i32) {
    %c0_i32 = arith.constant 0 : i32
    %c0_i32_0 = arith.constant 0 : i32
    %c0_i32_1 = arith.constant 0 : i32
    return %c0_i32, %c0_i32_0 : i32, i32
  }
}

</mosaic_0001>

<llo_original>
// kernel: aggregator_forward.1
$region0: #{aggregator_forward.1}
  #allocation0 [shape = 'u32[]', space=smem, size = 0x4, offset = 0x4, fixed_abs, tag = 'smem constant byte address 0x4 - core index']
  #allocation1 [shape = 'u32[144,128]{1,0:T(1,128)}', space=vmem, size = 0x12000, scoped, tag = 'internal scratch']
  #allocation2 [shape = 'f32[1,2]{1,0:T(1,128)}', space=vmem, size = 0x200, scoped, tag = 'scratch operand']
  %s0 = inlined_call_operand.vmem [shape: f32[8,2], index: 0, kind: input, shape index: {}]
  %s1 = inlined_call_operand.vmem [shape: f32[16,2], index: 1, kind: input, shape index: {}]
  %s2 = inlined_call_operand.vmem [shape: f32[1,16], index: 2, kind: input, shape index: {}]
  %s3 = inlined_call_operand.hbm [shape: f32[1,16], index: 3, kind: output, shape index: {}]
  %s4 = sld [smem:[#allocation0]]
  $region30: #{aggregator_forward.1} parent=0
    _
  %s6 = ssub.s32 1, %s4
  %s7 = scalar_select 0, %s6, %s4
  $region1: #{aggregator_forward.1} parent=0
    #allocation3 [shape = 'u8[512]{0}', space=vmem, size = 0x400, scoped, tag = 'output window, operand 0, single buffered']
    #allocation4 [shape = 's32[1]{0}', space=sflag, size = 0x4, scoped, tag = 'scoped memory for aggregator_forward.1']
    %8 = vsyncpa [#allocation4], 0
    // Predicated region
    $region2: #{aggregator_forward.1} parent=1 // pred_check
      _
    $region3: #{aggregator_forward.1} parent=1 // pred_check_branch
      %10 = sbr.rel (0) target = $region5
    $region4: #{aggregator_forward.1} parent=1 // pred_region
      _
    $region5: #{aggregator_forward.1} parent=1 // pred_fallthru
      _
    // Predicated region
    $region6: #{aggregator_forward.1} parent=1 // pred_check
      _
    $region7: #{aggregator_forward.1} parent=1 // pred_check_branch
      %12 = sbr.rel (0) target = $region9
    $region8: #{aggregator_forward.1} parent=1 // pred_region
      _
    $region9: #{aggregator_forward.1} parent=1 // pred_fallthru
      _
    // Predicated region
    $region10: #{aggregator_forward.1} parent=1 // pred_check
      _
    $region11: #{aggregator_forward.1} parent=1 // pred_check_branch
      %14 = sbr.rel (0) target = $region13
    $region12: #{aggregator_forward.1} parent=1 // pred_region
      _
    $region13: #{aggregator_forward.1} parent=1 // pred_fallthru
      _
    %p15 = scmp.eq.s32.totalorder 0, 0
    // Predicated region
    $region14: #{aggregator_forward.1} parent=1 // pred_check
      %p16 = pneg %p15
    $region15: #{aggregator_forward.1} parent=1 // pred_check_branch
      %18 = sbr.rel (%p16) target = $region17
    $region16: #{aggregator_forward.1} parent=1 // pred_region
      %vm19 = vcmask 8192
      %20 = vst.msk [vmem:[#allocation2] sm:$0x1] %vm19, 0.0
    $region17: #{aggregator_forward.1} parent=1 // pred_fallthru
      _
    %v21 = vld [vmem:[#allocation2] sm:$0x1]
    %v22 = vld [vmem:[%s0] sm:$0xff]
    %vm23 = vcmask 15360
    %v24 = vsel %vm23, %v22, 0.0
    %v25 = vrot.slane %v24, 4
    %v26 = vadd.f32 %v24, %v25
    %v27 = vrot.slane %v26, 2
    %v28 = vadd.f32 %v26, %v27
    %v29 = vrot.slane %v28, 1
    %v30 = vadd.f32 %v28, %v29
    %v31 = vadd.f32 %v21, %v30
    %vm32 = vcmask 8192
    %33 = vst.msk [vmem:[#allocation2] sm:$0x1] %vm32, %v31
    // Predicated region
    $region18: #{aggregator_forward.1} parent=1 // pred_check
      %p34 = pneg %p15
    $region19: #{aggregator_forward.1} parent=1 // pred_check_branch
      %36 = sbr.rel (%p34) target = $region21
    $region20: #{aggregator_forward.1} parent=1 // pred_region
      %v37 = vld [vmem:[#allocation2] sm:$0x1]
      %v38 = vmul.f32 %v37, 0.2
      %v39 = vld [vmem:[%s1] sm:$0xff]
      %v40 = vld [vmem:[%s1 + $0x8] sm:$0xff]
      %v41 = vld [vmem:[%s2] sm:$0x1]
      %v43 = vsel %vm23, %v38, 0
      %v46 = vsel %vm23, %v39, 0
      %v49 = vsel %vm23, %v40, 0
      %51 = vmatprep.subr.mxu0 0.0
      %52 = vmatpush1.xpose.msra.mxu0 %v46
      %53 = vmatprep.subr.mxu0 0.0
      %54 = vmatpush1.xpose.msra.mxu0 %v49
      %55 = vmatprep.subr.mxu0 0.0
      %56 = vmatpush1.xpose.msra.mxu0 0.0
      %57 = vmatprep.subr.mxu0 0.0
      %58 = vmatpush1.xpose.msra.mxu0 0.0
      %59 = vmatprep.subr.mxu0 0.0
      %60 = vmatpush1.xpose.msra.mxu0 0.0
      %61 = vmatprep.subr.mxu0 0.0
      %62 = vmatpush1.xpose.msra.mxu0 0.0
      %63 = vmatprep.subr.mxu0 0.0
      %64 = vmatpush1.xpose.msra.mxu0 0.0
      %65 = vmatprep.subr.mxu0 0.0
      %66 = vmatpush1.xpose.msra.mxu0 0.0
      %67 = vmatprep.subr.mxu0 0.0
      %68 = vmatpush1.xpose.msra.mxu0 0.0
      %69 = vmatprep.subr.mxu0 0.0
      %70 = vmatpush1.xpose.msra.mxu0 0.0
      %71 = vmatprep.subr.mxu0 0.0
      %72 = vmatpush1.xpose.msra.mxu0 0.0
      %73 = vmatprep.subr.mxu0 0.0
      %74 = vmatpush1.xpose.msra.mxu0 0.0
      %75 = vmatprep.subr.mxu0 0.0
      %76 = vmatpush1.xpose.msra.mxu0 0.0
      %77 = vmatprep.subr.mxu0 0.0
      %78 = vmatpush1.xpose.msra.mxu0 0.0
      %79 = vmatprep.subr.mxu0 0.0
      %80 = vmatpush1.xpose.msra.mxu0 0.0
      %81 = vmatprep.subr.mxu0 0.0
      %82 = vmatpush1.xpose.msra.mxu0 0.0
      %83 = vmatprep.subr.mxu0 0.0
      %84 = vmatpush1.xpose.msra.mxu0 0.0
      %85 = vmatprep.subr.mxu0 0.0
      %86 = vmatpush1.xpose.msra.mxu0 0.0
      %87 = vmatprep.subr.mxu0 0.0
      %88 = vmatpush1.xpose.msra.mxu0 0.0
      %89 = vmatprep.subr.mxu0 0.0
      %90 = vmatpush1.xpose.msra.mxu0 0.0
      %91 = vmatprep.subr.mxu0 0.0
      %92 = vmatpush1.xpose.msra.mxu0 0.0
      %93 = vmatprep.subr.mxu0 0.0
      %94 = vmatpush1.xpose.msra.mxu0 0.0
      %95 = vmatprep.subr.mxu0 0.0
      %96 = vmatpush1.xpose.msra.mxu0 0.0
      %97 = vmatprep.subr.mxu0 0.0
      %98 = vmatpush1.xpose.msra.mxu0 0.0
      %99 = vmatprep.subr.mxu0 0.0
      %100 = vmatpush1.xpose.msra.mxu0 0.0
      %101 = vmatprep.subr.mxu0 0.0
      %102 = vmatpush1.xpose.msra.mxu0 0.0
      %103 = vmatprep.subr.mxu0 0.0
      %104 = vmatpush1.xpose.msra.mxu0 0.0
      %105 = vmatprep.subr.mxu0 0.0
      %106 = vmatpush1.xpose.msra.mxu0 0.0
      %107 = vmatprep.subr.mxu0 0.0
      %108 = vmatpush1.xpose.msra.mxu0 0.0
      %109 = vmatprep.subr.mxu0 0.0
      %110 = vmatpush1.xpose.msra.mxu0 0.0
      %111 = vmatprep.subr.mxu0 0.0
      %112 = vmatpush1.xpose.msra.mxu0 0.0
      %113 = vmatprep.subr.mxu0 0.0
      %114 = vmatpush1.xpose.msra.mxu0 0.0
      %115 = vmatprep.mubr.f32.mxu0 0.0
      %116 = vmatmul.mubr.f32.gmra.mrb[0].mxu0 %v43
      %v117 = vpop.f32.mrb[0].mxu0
      %v118 = vadd.f32 %v41, %v117
      %v119 = vpop.f32.mrb[0].mxu0
      %120 = vdwg.mxu0
      %v121 = vmax.f32 %v118, 0.0
      %vm122 = vcmask 122880
      %123 = vst.msk [vmem:[#allocation3] sm:$0x1] %vm122, %v121
    $region21: #{aggregator_forward.1} parent=1 // pred_fallthru
      _
    // Predicated region
    $region22: #{aggregator_forward.1} parent=1 // pred_check
      _
    $region23: #{aggregator_forward.1} parent=1 // pred_check_branch
      %125 = sbr.rel (0) target = $region25
    $region24: #{aggregator_forward.1} parent=1 // pred_region
      %s127 = ssub.s32 16, 16
      %128 = vsyncadd [#allocation4], %s127
      %s130 = sshll.u32 [#allocation3], 4
      %s131 = int_to_ptr.vmem [resolvable:$true] %s130
      %133 = dma.vmem_to_hbm [thread:$0]  %s131, 16, %s3, [#allocation4]
    $region25: #{aggregator_forward.1} parent=1 // pred_fallthru
      _
    // Predicated region
    $region26: #{aggregator_forward.1} parent=1 // pred_check
      _
    $region27: #{aggregator_forward.1} parent=1 // pred_check_branch
      %135 = sbr.rel (0) target = $region29
    $region28: #{aggregator_forward.1} parent=1 // pred_region
      %136 = dma.done [#allocation4], 16
    $region29: #{aggregator_forward.1} parent=1 // pred_fallthru
      _
    %137 = vsyncpa [#allocation4], 1

</llo_original>
